<compile_context>
chip_gen: v6e
topology: v6e:2x2x1
jax: 0.10.0
libtpu: 0.0.40
codegen_flags: <defaults>
</compile_context>

<pallas_src>
import math
from functools import partial

import numpy as np
import jax
import jax.numpy as jnp
from jax.experimental import pallas as pl
from jax.experimental.pallas import tpu as pltpu


# ------------------------------------------------------------------ generation-aware budgets
def _tpu_kind():
    try:
        return jax.devices()[0].device_kind.lower()
    except Exception:
        return ""


_KIND = _tpu_kind()
_IS_V7 = ("v7" in _KIND) or ("tpu7" in _KIND) or ("7x" in _KIND)
_IS_TPU = "tpu" in _KIND

if _IS_V7 or not _IS_TPU:
    # v7x has only 64 MiB physical VMEM -> stay conservative (also the unknown-chip default).
    _VMEM_LIMIT = 32 * 1024 * 1024
    _ROW_BUDGET = 8 << 20
    _ATTN_BUDGET = 12 << 20
else:
    # v5e / v6e: 128 MiB physical VMEM -> larger tiles recover HBM-roofline fraction.
    _VMEM_LIMIT = 64 * 1024 * 1024
    _ROW_BUDGET = 24 << 20
    _ATTN_BUDGET = 24 << 20


def _cparams(sem):
    return pltpu.CompilerParams(dimension_semantics=sem,
                                vmem_limit_bytes=_VMEM_LIMIT)


def _row_tile(M, row_bytes, resident_bytes=0):
    """Largest row tile (multiple of 8) dividing M whose double-buffered activation
    footprint plus resident weights stays inside the per-generation VMEM budget."""
    avail = max(_ROW_BUDGET - resident_bytes, 512 * 1024)
    for t in (1024, 512, 256, 128, 64, 32, 16, 8):
        if M % t == 0 and 3 * t * row_bytes <= avail:
            return t
    return 8 if M % 8 == 0 else M


class KeyGen:
    def __init__(self, key):
        self.key = key

    def __call__(self):
        self.key, sub = jax.random.split(self.key)
        return sub


# ------------------------------------------------------------------ fused attention block kernel
def _attn_block_kernel(*refs, num_heads, scale, eps, has_mask):
    if has_mask:
        (x_ref, emb_ref, g_ref, bt_ref, qkvw_ref, qkvb_ref,
         projw_ref, projb_ref, relb_ref, mask_ref, o_ref) = refs
    else:
        (x_ref, emb_ref, g_ref, bt_ref, qkvw_ref, qkvb_ref,
         projw_ref, projb_ref, relb_ref, o_ref) = refs
        mask_ref = None

    wc, L, C = x_ref.shape
    hd = C // num_heads
    T = wc * L

    x32 = x_ref[...].astype(jnp.float32)                       # (wc, L, C)

    # --- LayerNorm (f32, VPU) + per-token contrast embedding (broadcast over windows) ---
    mu = jnp.mean(x32, axis=-1, keepdims=True)
    xc = x32 - mu
    var = jnp.mean(xc * xc, axis=-1, keepdims=True)
    h = xc * jax.lax.rsqrt(var + eps) * g_ref[...] + bt_ref[...]
    h = h + emb_ref[...][None]                                  # (1, L, C) broadcast

    # --- fused QKV projection: one lane-dense matmul (bf16 -> MXU, f32 acc) ---
    qkv = jnp.dot(h.reshape(T, C).astype(jnp.bfloat16), qkvw_ref[...],
                  preferred_element_type=jnp.float32) + qkvb_ref[...]
    qkv_b = qkv.astype(jnp.bfloat16)                            # single bf16 cast of (T, 3C)

    acc = jnp.zeros((T, C), jnp.float32)

    # TODO(synk): heads remain a static loop — Mosaic dot_general takes a single batch
    # dim and moving heads into it would need an in-kernel (L,heads) transpose; all
    # windows of the chunk are batched into every dot instead.
    for hh in range(num_heads):
        q = qkv_b[:, hh * hd:(hh + 1) * hd].reshape(wc, L, hd)
        k = qkv_b[:, C + hh * hd:C + (hh + 1) * hd].reshape(wc, L, hd)
        v = qkv_b[:, 2 * C + hh * hd:2 * C + (hh + 1) * hd].reshape(wc, L, hd)

        s = jnp.einsum('wld,wmd->wlm', q, k,
                       preferred_element_type=jnp.float32) * scale
        s = s + relb_ref[hh][None]                              # learned bias, resident
        if has_mask:
            s = s + mask_ref[...]                               # shift mask (shifted blocks only)
        s = s - jnp.max(s, axis=-1, keepdims=True)              # softmax kept in f32
        p = jnp.exp(s)
        p = p * pl.reciprocal(jnp.sum(p, axis=-1, keepdims=True), approx=True)

        o = jnp.einsum('wlm,wmd->wld', p.astype(jnp.bfloat16), v,
                       preferred_element_type=jnp.float32)
        # head merge without a lane concatenate: accumulate o_h @ proj_w[head rows]
        acc = acc + jnp.dot(o.reshape(T, hd).astype(jnp.bfloat16), projw_ref[hh],
                            preferred_element_type=jnp.float32)

    out = acc + projb_ref[...] + x32.reshape(T, C)              # residual fused in-kernel
    o_ref[...] = out.reshape(wc, L, C).astype(o_ref.dtype)


def _pick_window_chunk(nW, L, C, heads, has_mask):
    """Largest divisor of nW whose per-step VMEM footprint fits the attention budget,
    forced to give >=2 window-chunks whenever nW > 1 (so the pipeline can overlap)."""
    resident = (2 * C * 3 * C + 2 * C * C          # qkv_w / proj_w (bf16)
                + 4 * heads * L * L                # rel_bias (f32)
                + 4 * L * C + 64 * C)              # emb + small biases
    per_w = (16 * L * C                            # x in/out (f32) double-buffered
             + (8 * L * L if has_mask else 0)      # mask double-buffered
             + 6 * L * 3 * C                       # qkv f32 + bf16 copies
             + 8 * L * L + 12 * L * C)             # scores / acc / h intermediates
    avail = max(_ATTN_BUDGET - resident, 1 << 18)
    max_wc = max(int(avail // per_w), 1)
    divs = [d for d in range(1, nW + 1) if nW % d == 0]
    fit = [d for d in divs if d <= max_wc]
    wc = fit[-1] if fit else 1
    if nW > 1 and wc == nW:
        wc = max(d for d in divs if d < nW)        # keep >=2 chunks for pipelining
    return wc


def pallas_attention_block(xw, emb, gamma, beta, qkv_w, qkv_b, proj_w, proj_b,
                           rel_bias, mask, num_heads, eps=1e-5):
    # xw : (B, nW, L, C)   emb : (L, C)   rel_bias : (heads, L, L)
    # mask : (nW, L, L) for shifted blocks, None for unshifted blocks
    B, nW, L, C = xw.shape
    hd = C // num_heads
    scale = 1.0 / math.sqrt(hd)
    has_mask = mask is not None
    wc = _pick_window_chunk(nW, L, C, num_heads, has_mask)

    def res(shp):
        n = len(shp)
        return pl.BlockSpec(shp, lambda b, c: (0,) * n)

    in_specs = [
        pl.BlockSpec((None, wc, L, C), lambda b, c: (b, c, 0, 0)),
        res((L, C)),                        # contrast embedding (resident)
        res((1, C)), res((1, C)),           # LN1 gamma / beta
        res((C, 3 * C)), res((1, 3 * C)),   # qkv weight (bf16) / bias
        res((num_heads, hd, C)), res((1, C)),  # proj weight pre-split by head / bias
        res((num_heads, L, L)),             # learned relative bias (resident)
    ]
    args = [xw, emb, gamma.reshape(1, C), beta.reshape(1, C),
            qkv_w, qkv_b.reshape(1, 3 * C),
            proj_w.reshape(num_heads, hd, C), proj_b.reshape(1, C), rel_bias]
    if has_mask:
        in_specs.append(pl.BlockSpec((wc, L, L), lambda b, c: (c, 0, 0)))
        args.append(mask)

    return pl.pallas_call(
        partial(_attn_block_kernel, num_heads=num_heads, scale=scale, eps=eps,
                has_mask=has_mask),
        out_shape=jax.ShapeDtypeStruct((B, nW, L, C), xw.dtype),
        grid=(B, nW // wc),
        in_specs=in_specs,
        out_specs=pl.BlockSpec((None, wc, L, C), lambda b, c: (b, c, 0, 0)),
        compiler_params=_cparams(("parallel", "parallel")),
    )(*args)


# ------------------------------------------------------------------ fused MLP block kernel
def _mlp_block_kernel(x_ref, g_ref, b_ref, w1_ref, b1_ref, w2_ref, b2_ref, o_ref, *, eps):
    x = x_ref[...].astype(jnp.float32)
    mu = jnp.mean(x, axis=-1, keepdims=True)
    xc = x - mu
    var = jnp.mean(xc * xc, axis=-1, keepdims=True)
    h = xc * jax.lax.rsqrt(var + eps) * g_ref[...] + b_ref[...]
    y = jnp.dot(h.astype(jnp.bfloat16), w1_ref[...],
                preferred_element_type=jnp.float32) + b1_ref[...]
    # TODO(synk): PyTorch nn.GELU default is exact erf; tanh approximation used here.
    y = jax.nn.gelu(y, approximate=True)
    z = jnp.dot(y.astype(jnp.bfloat16), w2_ref[...],
                preferred_element_type=jnp.float32) + b2_ref[...]
    o_ref[...] = (x + z).astype(o_ref.dtype)                    # residual fused


def pallas_mlp_block(x2d, gamma, beta, w1, b1, w2, b2, eps=1e-5):
    M, C = x2d.shape
    Ch = w1.shape[1]
    resident = 2 * (C * Ch + Ch * C) + 4 * (2 * C + 2 * Ch)
    tm = _row_tile(M, 4 * (3 * C + 2 * Ch), resident)
    return pl.pallas_call(
        partial(_mlp_block_kernel, eps=eps),
        out_shape=jax.ShapeDtypeStruct((M, C), x2d.dtype),
        grid=(M // tm,),
        in_specs=[
            pl.BlockSpec((tm, C), lambda i: (i, 0)),
            pl.BlockSpec((1, C), lambda i: (0, 0)),
            pl.BlockSpec((1, C), lambda i: (0, 0)),
            pl.BlockSpec((C, Ch), lambda i: (0, 0)),
            pl.BlockSpec((1, Ch), lambda i: (0, 0)),
            pl.BlockSpec((Ch, C), lambda i: (0, 0)),
            pl.BlockSpec((1, C), lambda i: (0, 0)),
        ],
        out_specs=pl.BlockSpec((tm, C), lambda i: (i, 0)),
        compiler_params=_cparams(("parallel",)),
    )(x2d, gamma.reshape(1, C), beta.reshape(1, C),
      w1, b1.reshape(1, Ch), w2, b2.reshape(1, C))


# ------------------------------------------------------------------ LN+linear (patch merge)
def _ln_linear_kernel(x_ref, g_ref, b_ref, w_ref, wb_ref, o_ref, *, eps):
    x = x_ref[...].astype(jnp.float32)
    mu = jnp.mean(x, axis=-1, keepdims=True)
    xc = x - mu
    var = jnp.mean(xc * xc, axis=-1, keepdims=True)
    h = xc * jax.lax.rsqrt(var + eps) * g_ref[...] + b_ref[...]
    y = jnp.dot(h.astype(jnp.bfloat16), w_ref[...],
                preferred_element_type=jnp.float32) + wb_ref[...]
    o_ref[...] = y.astype(o_ref.dtype)


def pallas_ln_linear(x2d, gamma, beta, w, wb, eps=1e-5):
    M, Din = x2d.shape
    Dout = w.shape[1]
    resident = 2 * Din * Dout + 4 * (2 * Din + Dout)
    tm = _row_tile(M, 4 * (2 * Din + Dout), resident)
    return pl.pallas_call(
        partial(_ln_linear_kernel, eps=eps),
        out_shape=jax.ShapeDtypeStruct((M, Dout), x2d.dtype),
        grid=(M // tm,),
        in_specs=[
            pl.BlockSpec((tm, Din), lambda i: (i, 0)),
            pl.BlockSpec((1, Din), lambda i: (0, 0)),
            pl.BlockSpec((1, Din), lambda i: (0, 0)),
            pl.BlockSpec((Din, Dout), lambda i: (0, 0)),
            pl.BlockSpec((1, Dout), lambda i: (0, 0)),
        ],
        out_specs=pl.BlockSpec((tm, Dout), lambda i: (i, 0)),
        compiler_params=_cparams(("parallel",)),
    )(x2d, gamma.reshape(1, Din), beta.reshape(1, Din), w, wb.reshape(1, Dout))


# ------------------------------------------------------------------ linear + group-LN (patch expand, fused)
def _linear_groupnorm_kernel(x_ref, w_ref, b_ref, gmat_ref, gmat_t_ref,
                             gamma_ref, beta_ref, o_ref, *, inv_group, eps):
    y = jnp.dot(x_ref[...].astype(jnp.bfloat16), w_ref[...],
                preferred_element_type=jnp.float32) + b_ref[...]
    # Group LayerNorm over each cout-wide lane group without lane reshapes:
    # per-group sums via tiny (Dout,groups)/(groups,Dout) matmuls, broadcast back.
    mu = jnp.dot(jnp.dot(y, gmat_ref[...], preferred_element_type=jnp.float32),
                 gmat_t_ref[...], preferred_element_type=jnp.float32) * inv_group
    yc = y - mu
    var = jnp.dot(jnp.dot(yc * yc, gmat_ref[...], preferred_element_type=jnp.float32),
                  gmat_t_ref[...], preferred_element_type=jnp.float32) * inv_group
    out = yc * jax.lax.rsqrt(var + eps) * gamma_ref[...] + beta_ref[...]
    o_ref[...] = out.astype(o_ref.dtype)


def pallas_linear_groupnorm(x2d, w, b, cout, gamma, beta, eps=1e-5):
    M, Din = x2d.shape
    Dout = w.shape[1]
    groups = Dout // cout
    gmat = (jnp.arange(Dout)[:, None] // cout == jnp.arange(groups)[None, :]).astype(jnp.float32)
    gamma_t = jnp.tile(gamma, groups).reshape(1, Dout)
    beta_t = jnp.tile(beta, groups).reshape(1, Dout)
    resident = 2 * Din * Dout + 4 * (2 * Dout * groups + 3 * Dout)
    tm = _row_tile(M, 4 * (Din + 4 * Dout), resident)
    return pl.pallas_call(
        partial(_linear_groupnorm_kernel, inv_group=1.0 / cout, eps=eps),
        out_shape=jax.ShapeDtypeStruct((M, Dout), x2d.dtype),
        grid=(M // tm,),
        in_specs=[
            pl.BlockSpec((tm, Din), lambda i: (i, 0)),
            pl.BlockSpec((Din, Dout), lambda i: (0, 0)),
            pl.BlockSpec((1, Dout), lambda i: (0, 0)),
            pl.BlockSpec((Dout, groups), lambda i: (0, 0)),
            pl.BlockSpec((groups, Dout), lambda i: (0, 0)),
            pl.BlockSpec((1, Dout), lambda i: (0, 0)),
            pl.BlockSpec((1, Dout), lambda i: (0, 0)),
        ],
        out_specs=pl.BlockSpec((tm, Dout), lambda i: (i, 0)),
        compiler_params=_cparams(("parallel",)),
    )(x2d, w, b.reshape(1, Dout), gmat, gmat.T, gamma_t, beta_t)


# ------------------------------------------------------------------ fused concat + compress
def _dual_linear_kernel(x_ref, y_ref, wx_ref, wy_ref, b_ref, o_ref):
    out = jnp.dot(x_ref[...].astype(jnp.bfloat16), wx_ref[...],
                  preferred_element_type=jnp.float32)
    out = out + jnp.dot(y_ref[...].astype(jnp.bfloat16), wy_ref[...],
                        preferred_element_type=jnp.float32)
    o_ref[...] = (out + b_ref[...]).astype(o_ref.dtype)


def pallas_dual_linear(x2d, y2d, wx, wy, b):
    M, Dx = x2d.shape
    Dy = y2d.shape[1]
    Dout = wx.shape[1]
    resident = 2 * (Dx + Dy) * Dout + 4 * Dout
    tm = _row_tile(M, 4 * (Dx + Dy + Dout), resident)
    return pl.pallas_call(
        _dual_linear_kernel,
        out_shape=jax.ShapeDtypeStruct((M, Dout), x2d.dtype),
        grid=(M // tm,),
        in_specs=[
            pl.BlockSpec((tm, Dx), lambda i: (i, 0)),
            pl.BlockSpec((tm, Dy), lambda i: (i, 0)),
            pl.BlockSpec((Dx, Dout), lambda i: (0, 0)),
            pl.BlockSpec((Dy, Dout), lambda i: (0, 0)),
            pl.BlockSpec((1, Dout), lambda i: (0, 0)),
        ],
        out_specs=pl.BlockSpec((tm, Dout), lambda i: (i, 0)),
        compiler_params=_cparams(("parallel",)),
    )(x2d, y2d, wx, wy, b.reshape(1, Dout))


# ------------------------------------------------------------------ plain LayerNorm
def _layernorm_kernel(x_ref, g_ref, b_ref, o_ref, *, eps):
    x = x_ref[...].astype(jnp.float32)
    mu = jnp.mean(x, axis=-1, keepdims=True)
    xc = x - mu
    var = jnp.mean(xc * xc, axis=-1, keepdims=True)
    y = xc * jax.lax.rsqrt(var + eps)
    o_ref[...] = (y * g_ref[...] + b_ref[...]).astype(o_ref.dtype)


def pallas_layernorm(x, gamma, beta, eps=1e-5):
    shp = x.shape
    C = shp[-1]
    x2 = x.reshape(-1, C)
    M = x2.shape[0]
    tm = _row_tile(M, 12 * C)
    out = pl.pallas_call(
        partial(_layernorm_kernel, eps=eps),
        out_shape=jax.ShapeDtypeStruct((M, C), x.dtype),
        grid=(M // tm,),
        in_specs=[
            pl.BlockSpec((tm, C), lambda i: (i, 0)),
            pl.BlockSpec((1, C), lambda i: (0, 0)),
            pl.BlockSpec((1, C), lambda i: (0, 0)),
        ],
        out_specs=pl.BlockSpec((tm, C), lambda i: (i, 0)),
        compiler_params=_cparams(("parallel",)),
    )(x2, gamma.reshape(1, C), beta.reshape(1, C))
    return out.reshape(shp)


# ------------------------------------------------------------------ windowing glue
def window_partition(x, wh, ww):
    B, N, H, W, C = x.shape
    x = x.reshape(B, N, H // wh, wh, W // ww, ww, C)
    x = x.transpose(0, 2, 4, 1, 3, 5, 6)          # (B, H/wh, W/ww, N, wh, ww, C)
    return x.reshape(B, (H // wh) * (W // ww), N * wh * ww, C)


def window_reverse(xw, B, N, H, W, wh, ww):
    C = xw.shape[-1]
    x = xw.reshape(B, H // wh, W // ww, N, wh, ww, C)
    x = x.transpose(0, 3, 1, 4, 2, 5, 6)
    return x.reshape(B, N, H, W, C)


def make_shift_mask(H, W, wh, ww, sh, sw, N):
    nW = (H // wh) * (W // ww)
    L = N * wh * ww
    img = np.zeros((H, W), np.int32)
    cnt = 0
    for hs in (slice(0, -wh), slice(-wh, -sh), slice(-sh, None)):
        for ws in (slice(0, -ww), slice(-ww, -sw), slice(-sw, None)):
            img[hs, ws] = cnt
            cnt += 1
    m = img.reshape(H // wh, wh, W // ww, ww).transpose(0, 2, 1, 3).reshape(nW, wh * ww)
    m = np.tile(m, (1, N))                        # token order is (contrast, wh, ww)
    diff = m[:, :, None] - m[:, None, :]
    mask = np.where(diff != 0, -1e9, 0.0).astype(np.float32)
    return jnp.asarray(mask)


# ------------------------------------------------------------------ model pieces
def mc_encoder_block(p, x, sel, window_size, shift_size, num_heads):
    B, N, H, W, C = x.shape
    wh, ww = window_size
    sh, sw = shift_size
    shifted = bool(sh or sw)

    # per-token contrast embedding in window token order (contrast, wh, ww) -> (L, C)
    emb = jnp.repeat(p["contrast_embed"][sel], wh * ww, axis=0)

    # learned (contrast x spatial) attention bias sliced by selected contrasts
    idx = (sel[:, None] * (wh * ww) + jnp.arange(wh * ww)[None, :]).reshape(-1)
    rel_bias = p["rel_bias"][:, idx][:, :, idx]            # (heads, L, L)
    mask = make_shift_mask(H, W, wh, ww, sh, sw, N) if shifted else None

    xr = jnp.roll(x, shift=(-sh, -sw), axis=(2, 3)) if shifted else x
    xw = window_partition(xr, wh, ww)                      # (B, nW, L, C)

    # fused LN1 + embed + QKV + attention + proj + residual  (single HBM pass)
    ow = pallas_attention_block(xw, emb, p["ln1_g"], p["ln1_b"],
                                p["qkv_w"], p["qkv_b"], p["proj_w"], p["proj_b"],
                                rel_bias, mask, num_heads)
    o = window_reverse(ow, B, N, H, W, wh, ww)
    if shifted:
        o = jnp.roll(o, shift=(sh, sw), axis=(2, 3))

    # fused LN2 + fc1(GELU) + fc2 + residual  (single HBM pass)
    y = pallas_mlp_block(o.reshape(-1, C), p["ln2_g"], p["ln2_b"],
                         p["fc1_w"], p["fc1_b"], p["fc2_w"], p["fc2_b"])
    return y.reshape(B, N, H, W, C)


def patch_partition(p, x, patch_size, reduction):
    B, N, H, W, C = x.shape
    ps = patch_size
    x = x.reshape(B, N, H // ps, ps, W // ps, ps, C)
    x = x.transpose(0, 1, 2, 4, 3, 5, 6).reshape(B, N, H // ps, W // ps, ps * ps * C)
    if reduction:
        out = pallas_ln_linear(x.reshape(-1, ps * ps * C),
                               p["norm_g"], p["norm_b"], p["red_w"], p["red_b"])
        return out.reshape(B, N, H // ps, W // ps, ps * C)
    return pallas_layernorm(x, p["norm_g"], p["norm_b"])


def patch_expansion(p, x, patch_size):
    B, N, H, W, C = x.shape
    ps = patch_size
    cout = C // ps
    # fused: expansion linear + per-group (cout-wide) LayerNorm in one HBM pass;
    # the LN over cout commutes with the pixel-shuffle rearrangement below.
    y = pallas_linear_groupnorm(x.reshape(-1, C), p["exp_w"], p["exp_b"],
                                cout, p["norm_g"], p["norm_b"])
    y = y.reshape(B, N, H, W, ps, ps, cout)
    y = y.transpose(0, 1, 2, 4, 3, 5, 6).reshape(B, N, H * ps, W * ps, cout)
    return y


def encoder_down_layer(p, x, sel, window_size, shift_size):
    h = patch_partition(p["patches"], x, p["patch_size"], p["reduction"])
    h = mc_encoder_block(p["blocks"][0], h, sel, window_size, (0, 0), p["num_heads"])
    h = mc_encoder_block(p["blocks"][1], h, sel, window_size, shift_size, p["num_heads"])
    return h


def encoder_up_layer(p, x, skip, sel, window_size, shift_size):
    x = patch_expansion(p["expands"], x, p["patch_size"])
    B, N, H, W, C = x.shape
    # fused concat + compress: the concatenated tensor never hits HBM
    w = p["compress_w"]
    y = pallas_dual_linear(x.reshape(-1, C), skip.reshape(-1, C),
                           w[:C], w[C:], p["compress_b"])
    x = y.reshape(B, N, H, W, -1)
    x = mc_encoder_block(p["blocks"][0], x, sel, window_size, (0, 0), p["num_heads"])
    x = mc_encoder_block(p["blocks"][1], x, sel, window_size, shift_size, p["num_heads"])
    return x


def encoder_forward(params, x, sel, window_size, shift_size):
    skips, outs = [], []
    feat = encoder_down_layer(params["patches"], x, sel, window_size, shift_size)
    for lp in params["down"]:
        skips.append(feat)
        feat = encoder_down_layer(lp, feat, sel, window_size, shift_size)
    bh = params["bottleneck_heads"]
    feat = mc_encoder_block(params["bottleneck"][0], feat, sel, window_size, (0, 0), bh)
    feat = mc_encoder_block(params["bottleneck"][1], feat, sel, window_size, shift_size, bh)
    outs.append(feat)
    for lp in params["up"]:
        feat = encoder_up_layer(lp, feat, skips.pop(), sel, window_size, shift_size)
        outs.append(feat)
    return outs


# ------------------------------------------------------------------ parameter init
def _lin_init(kg, din, dout, std=0.02):
    # matmul weights stored in bf16 (MXU-native); biases / LN params kept in f32
    w = (jax.random.normal(kg(), (din, dout), jnp.float32) * std).astype(jnp.bfloat16)
    return w, jnp.zeros((dout,), jnp.float32)


def init_block(kg, dim, window_size, num_contrasts, num_heads):
    wh, ww = window_size
    Lfull = num_contrasts * wh * ww
    qkv_w, qkv_b = _lin_init(kg, dim, 3 * dim)
    proj_w, proj_b = _lin_init(kg, dim, dim)
    fc1_w, fc1_b = _lin_init(kg, dim, 4 * dim)
    fc2_w, fc2_b = _lin_init(kg, 4 * dim, dim)
    return dict(
        ln1_g=jnp.ones((dim,), jnp.float32), ln1_b=jnp.zeros((dim,), jnp.float32),
        contrast_embed=jax.random.normal(kg(), (num_contrasts, dim), jnp.float32) * 0.02,
        qkv_w=qkv_w, qkv_b=qkv_b, proj_w=proj_w, proj_b=proj_b,
        rel_bias=jax.random.normal(kg(), (num_heads, Lfull, Lfull), jnp.float32) * 0.02,
        ln2_g=jnp.ones((dim,), jnp.float32), ln2_b=jnp.zeros((dim,), jnp.float32),
        fc1_w=fc1_w, fc1_b=fc1_b, fc2_w=fc2_w, fc2_b=fc2_b,
    )


def init_down_layer(kg, dim, window_size, num_contrasts, num_heads, patch_size, reduction):
    pdim = dim * patch_size ** 2
    patches = dict(norm_g=jnp.ones((pdim,), jnp.float32), norm_b=jnp.zeros((pdim,), jnp.float32))
    if reduction:
        patches["red_w"] = (jax.random.normal(kg(), (pdim, dim * patch_size), jnp.float32)
                            * 0.02).astype(jnp.bfloat16)
        patches["red_b"] = jnp.zeros((dim * patch_size,), jnp.float32)
        out_dim = dim * patch_size
    else:
        out_dim = pdim
    blocks = [init_block(kg, out_dim, window_size, num_contrasts, num_heads) for _ in range(2)]
    return dict(patches=patches, blocks=blocks, num_heads=num_heads,
                patch_size=patch_size, reduction=reduction)


def init_up_layer(kg, dim, window_size, num_contrasts, num_heads, patch_size):
    cout = dim // patch_size
    expands = dict(
        exp_w=(jax.random.normal(kg(), (dim, dim * patch_size), jnp.float32)
               * 0.02).astype(jnp.bfloat16),
        exp_b=jnp.zeros((dim * patch_size,), jnp.float32),
        norm_g=jnp.ones((cout,), jnp.float32), norm_b=jnp.zeros((cout,), jnp.float32),
    )
    compress_w, compress_b = _lin_init(kg, 2 * cout, cout)
    blocks = [init_block(kg, cout, window_size, num_contrasts, num_heads) for _ in range(2)]
    return dict(expands=expands, compress_w=compress_w, compress_b=compress_b,
                blocks=blocks, num_heads=num_heads, patch_size=patch_size)


def init_encoder(kg, dim, num_layers, window_size, shift_size, num_contrasts, num_heads, patch_size=2):
    params = {}
    params["patches"] = init_down_layer(kg, dim, window_size, num_contrasts,
                                        num_heads, patch_size * 2, False)
    nl = num_layers - 1
    params["down"] = [
        init_down_layer(kg, dim * (1 << i) * patch_size ** 4, window_size, num_contrasts,
                        num_heads * (1 << (i + 1)), patch_size, True)
        for i in range(nl)
    ]
    bdim = dim * (1 << nl) * patch_size ** 4
    bheads = num_heads * (1 << nl)
    params["bottleneck"] = [init_block(kg, bdim, window_size, num_contrasts, bheads) for _ in range(2)]
    params["bottleneck_heads"] = bheads
    params["up"] = [
        init_up_layer(kg, dim * (1 << i) * patch_size ** 4, window_size, num_contrasts,
                      num_heads * (1 << (i + 1)), patch_size)
        for i in range(nl, 0, -1)
    ]
    return params


# ------------------------------------------------------------------ main
if __name__ == "__main__":
    key = jax.random.PRNGKey(0)
    kparam, kx = jax.random.split(key)

    dim, num_layers, patch_size = 2, 2, 2
    window_size, shift_size = (4, 4), (2, 2)
    num_contrasts, num_heads = 4, 2
    B, H, W = 2, 32, 32

    selected_contrasts = jnp.array([0, 2, 3], dtype=jnp.int32)   # N = 3 selected contrasts
    N = int(selected_contrasts.shape[0])

    params = init_encoder(KeyGen(kparam), dim, num_layers, window_size, shift_size,
                          num_contrasts, num_heads, patch_size)
    x = jax.random.normal(kx, (B, N, H, W, dim), jnp.float32)

    outs = encoder_forward(params, x, selected_contrasts, window_size, shift_size)
    outs = jax.block_until_ready(outs)

    # sanity: bottleneck feature + one up-level feature
    assert outs[0].shape == (B, N, H // 8, W // 8, dim * 2 * patch_size ** 4)
    assert outs[1].shape == (B, N, H // 4, W // 4, dim * patch_size ** 4)
    print("KERNEL_OK")
</pallas_src>

<mosaic_0001>
module attributes {stable_mosaic.version = 11 : i64} {
  func.func @_layernorm_kernel(%arg0: i32, %arg1: memref<128x32xf32, #tpu.memory_space<vmem>>, %arg2: memref<1x32xf32, #tpu.memory_space<vmem>>, %arg3: memref<1x32xf32, #tpu.memory_space<vmem>>, %arg4: memref<128x32xf32, #tpu.memory_space<vmem>>) attributes {dimension_semantics = [#tpu.dimension_semantics<parallel>], iteration_bounds = array<i64: 3>, scalar_prefetch = 0 : i64, scratch_operands = 0 : i64, tpu.core_type = #tpu.core_type<tc>, window_params = [{transform_indices = @transform_0, window_bounds = array<i64: 128, 32>}, {pipeline_mode = #tpu.pipeline_mode<synchronous>, transform_indices = @transform_1, window_bounds = array<i64: 1, 32>}, {pipeline_mode = #tpu.pipeline_mode<synchronous>, transform_indices = @transform_2, window_bounds = array<i64: 1, 32>}, {transform_indices = @transform_3, window_bounds = array<i64: 128, 32>}]} {
    %c0 = arith.constant 0 : index
    %c0_0 = arith.constant 0 : index
    %0 = vector.load %arg1[%c0, %c0_0] : memref<128x32xf32, #tpu.memory_space<vmem>>, vector<128x32xf32>
    %cst = arith.constant dense<0.000000e+00> : vector<128xf32>
    %1 = vector.multi_reduction <add>, %0, %cst [1] : vector<128x32xf32> to vector<128xf32>
    %2 = vector.shape_cast %1 : vector<128xf32> to vector<128x1xf32>
    %cst_1 = arith.constant 3.200000e+01 : f32
    %3 = vector.broadcast %cst_1 : f32 to vector<128x1xf32>
    %4 = arith.divf %2, %3 : vector<128x1xf32>
    %5 = vector.broadcast %4 : vector<128x1xf32> to vector<128x32xf32>
    %6 = arith.subf %0, %5 : vector<128x32xf32>
    %7 = arith.mulf %6, %6 : vector<128x32xf32>
    %cst_2 = arith.constant dense<0.000000e+00> : vector<128xf32>
    %8 = vector.multi_reduction <add>, %7, %cst_2 [1] : vector<128x32xf32> to vector<128xf32>
    %9 = vector.shape_cast %8 : vector<128xf32> to vector<128x1xf32>
    %cst_3 = arith.constant 3.200000e+01 : f32
    %10 = vector.broadcast %cst_3 : f32 to vector<128x1xf32>
    %11 = arith.divf %9, %10 : vector<128x1xf32>
    %cst_4 = arith.constant 9.99999974E-6 : f32
    %12 = vector.broadcast %cst_4 : f32 to vector<128x1xf32>
    %13 = arith.addf %11, %12 : vector<128x1xf32>
    %14 = math.rsqrt %13 : vector<128x1xf32>
    %15 = vector.broadcast %14 : vector<128x1xf32> to vector<128x32xf32>
    %16 = arith.mulf %6, %15 : vector<128x32xf32>
    %c0_5 = arith.constant 0 : index
    %c0_6 = arith.constant 0 : index
    %17 = vector.load %arg2[%c0_5, %c0_6] : memref<1x32xf32, #tpu.memory_space<vmem>>, vector<1x32xf32>
    %18 = vector.broadcast %17 : vector<1x32xf32> to vector<128x32xf32>
    %19 = arith.mulf %16, %18 : vector<128x32xf32>
    %c0_7 = arith.constant 0 : index
    %c0_8 = arith.constant 0 : index
    %20 = vector.load %arg3[%c0_7, %c0_8] : memref<1x32xf32, #tpu.memory_space<vmem>>, vector<1x32xf32>
    %21 = vector.broadcast %20 : vector<1x32xf32> to vector<128x32xf32>
    %22 = arith.addf %19, %21 : vector<128x32xf32>
    %c0_9 = arith.constant 0 : index
    %c0_10 = arith.constant 0 : index
    %23 = vector.load %arg4[%c0_9, %c0_10] : memref<128x32xf32, #tpu.memory_space<vmem>>, vector<128x32xf32>
    tpu.vector_store %arg4[%c0_9, %c0_10], %22 {strides = array<i32>} : memref<128x32xf32, #tpu.memory_space<vmem>>, vector<128x32xf32>,
    return
  }
  func.func @transform_0(%arg0: i32) -> (i32, i32) {
    %c0_i32 = arith.constant 0 : i32
    %c0_i32_0 = arith.constant 0 : i32
    return %arg0, %c0_i32 : i32, i32
  }
  func.func @transform_1(%arg0: i32) -> (i32, i32) {
    %c0_i32 = arith.constant 0 : i32
    %c0_i32_0 = arith.constant 0 : i32
    %c0_i32_1 = arith.constant 0 : i32
    return %c0_i32, %c0_i32_0 : i32, i32
  }
  func.func @transform_2(%arg0: i32) -> (i32, i32) {
    %c0_i32 = arith.constant 0 : i32
    %c0_i32_0 = arith.constant 0 : i32
    %c0_i32_1 = arith.constant 0 : i32
    return %c0_i32, %c0_i32_0 : i32, i32
  }
  func.func @transform_3(%arg0: i32) -> (i32, i32) {
    %c0_i32 = arith.constant 0 : i32
    %c0_i32_0 = arith.constant 0 : i32
    return %arg0, %c0_i32 : i32, i32
  }
}

</mosaic_0001>

<llo_original>
// kernel: tpu_custom_call.1
$region0: #{tpu_custom_call.1}
  #allocation0 [shape = 'u32[]', space=smem, size = 0x4, offset = 0x4, fixed_abs, tag = 'smem constant byte address 0x4 - core index']
  #allocation1 [shape = 'u32[144,128]{1,0:T(1,128)}', space=vmem, size = 0x12000, scoped, tag = 'internal scratch']
  %s0 = inlined_call_operand.vmem [shape: f32[384,32], index: 0, kind: input, shape index: {}]
  %s1 = inlined_call_operand.vmem [shape: f32[1,32], index: 1, kind: input, shape index: {}]
  %s2 = inlined_call_operand.vmem [shape: f32[1,32], index: 2, kind: input, shape index: {}]
  %s3 = inlined_call_operand.vmem [shape: f32[384,32], index: 3, kind: output, shape index: {}]
  %s4 = sld [smem:[#allocation0]]
  $region45: #{tpu_custom_call.1} parent=0
    _
  %s6 = ssub.s32 1, %s4
  %s7 = scalar_select 0, %s6, %s4
  loop: start=0, step=1, limit=5
  $region2: #{tpu_custom_call.1} parent=0 // loop_pre_header
    _
  $region3: #{tpu_custom_call.1} parent=0 // loop_header
    %s9 = sphi 0, %s13
    %p10 = scmp.ge.s32.totalorder %s9, 5
    %s19 = sphi 0, %s21
    %s22 = sphi 0, %s19
    %s23 = sphi 0, %s22
    %s39 = sphi 0, %s23
    %s43 = sphi 0, %s43
    %s45 = sphi 0, %s43
    %s46 = sphi 0, %s45
    %s60 = sphi 0, %s46
    %s64 = sphi 0, %s64
    %s66 = sphi 0, %s64
    %s67 = sphi 0, %s66
    %s81 = sphi 0, %s67
    %s87 = sphi 0, %s89
    %s90 = sphi 0, %s87
    %s91 = sphi 0, %s90
    %s107 = sphi 0, %s91
  $region4: #{tpu_custom_call.1} parent=0 // loop_header_branch
    %12 = sbr.rel (%p10) target = $region8
  $region5: #{tpu_custom_call.1} parent=0 // loop_body
    %s14 = ssub.s32 %s9, 1
    %s15 = ssub.s32 %s9, 2
    %s16 = sadd.s32 %s9, 1
    %s17 = ssub.s32 %s9, %s16
    %p18 = scmp.eq.s32.totalorder %s17, 0
    %s20 = sadd.s32 %s19, 1
    %s21 = scalar_select %p18, %s19, %s20
    %p24 = pneg %p18
    %p25 = scmp.eq.s32.totalorder %s9, 2
    %p26 = por %p24, %p25
    %p27 = scmp.ne.s32.totalorder %s19, %s22
    %p28 = scmp.eq.s32.totalorder %s9, 0
    %p29 = por %p27, %p28
    %p30 = scmp.ne.s32.totalorder %s19, %s22
    %p31 = scmp.eq.s32.totalorder %s14, 2
    %p32 = por %p30, %p31
    %p33 = scmp.ne.s32.totalorder %s22, %s23
    %p34 = scmp.eq.s32.totalorder %s14, 0
    %p35 = por %p33, %p34
    %p36 = scmp.ne.s32.totalorder %s22, %s23
    %p37 = scmp.eq.s32.totalorder %s15, 2
    %p38 = por %p36, %p37
    %p40 = scmp.ne.s32.totalorder %s23, %s39
    %p41 = scmp.eq.s32.totalorder %s15, 0
    %p42 = por %p40, %p41
    %s44 = sadd.s32 %s43, 1
    %p47 = scmp.eq.s32.totalorder %s9, 2
    %p48 = scmp.ne.s32.totalorder %s43, %s45
    %p49 = scmp.eq.s32.totalorder %s9, 0
    %p50 = por %p48, %p49
    %p51 = scmp.ne.s32.totalorder %s43, %s45
    %p52 = scmp.eq.s32.totalorder %s14, 2
    %p53 = por %p51, %p52
    %p54 = scmp.ne.s32.totalorder %s45, %s46
    %p55 = scmp.eq.s32.totalorder %s14, 0
    %p56 = por %p54, %p55
    %p57 = scmp.ne.s32.totalorder %s45, %s46
    %p58 = scmp.eq.s32.totalorder %s15, 2
    %p59 = por %p57, %p58
    %p61 = scmp.ne.s32.totalorder %s46, %s60
    %p62 = scmp.eq.s32.totalorder %s15, 0
    %p63 = por %p61, %p62
    %s65 = sadd.s32 %s64, 1
    %p68 = scmp.eq.s32.totalorder %s9, 2
    %p69 = scmp.ne.s32.totalorder %s64, %s66
    %p70 = scmp.eq.s32.totalorder %s9, 0
    %p71 = por %p69, %p70
    %p72 = scmp.ne.s32.totalorder %s64, %s66
    %p73 = scmp.eq.s32.totalorder %s14, 2
    %p74 = por %p72, %p73
    %p75 = scmp.ne.s32.totalorder %s66, %s67
    %p76 = scmp.eq.s32.totalorder %s14, 0
    %p77 = por %p75, %p76
    %p78 = scmp.ne.s32.totalorder %s66, %s67
    %p79 = scmp.eq.s32.totalorder %s15, 2
    %p80 = por %p78, %p79
    %p82 = scmp.ne.s32.totalorder %s67, %s81
    %p83 = scmp.eq.s32.totalorder %s15, 0
    %p84 = por %p82, %p83
    %s85 = ssub.s32 %s9, %s16
    %p86 = scmp.eq.s32.totalorder %s85, 0
    %s88 = sadd.s32 %s87, 1
    %s89 = scalar_select %p86, %s87, %s88
    %p92 = pneg %p86
    %p93 = scmp.eq.s32.totalorder %s9, 2
    %p94 = por %p92, %p93
    %p95 = scmp.ne.s32.totalorder %s87, %s90
    %p96 = scmp.eq.s32.totalorder %s9, 0
    %p97 = por %p95, %p96
    %p98 = scmp.ne.s32.totalorder %s87, %s90
    %p99 = scmp.eq.s32.totalorder %s14, 2
    %p100 = por %p98, %p99
    %p101 = scmp.ne.s32.totalorder %s90, %s91
    %p102 = scmp.eq.s32.totalorder %s14, 0
    %p103 = por %p101, %p102
    %p104 = scmp.ne.s32.totalorder %s90, %s91
    %p105 = scmp.eq.s32.totalorder %s15, 2
    %p106 = por %p104, %p105
    %p108 = scmp.ne.s32.totalorder %s91, %s107
    %p109 = scmp.eq.s32.totalorder %s15, 0
    %p110 = por %p108, %p109
    %p111 = scmp.le.s32.totalorder 1, %s9
    %p112 = scmp.lt.s32.totalorder %s9, 4
    %p113 = pnand %p111, %p112
    %p114 = pneg %p113
    // Predicated region
    $region9: #{tpu_custom_call.1} parent=5 // pred_check
      _
    $region10: #{tpu_custom_call.1} parent=5 // pred_check_branch
      %116 = sbr.rel (%p113) target = $region12
    $region11: #{tpu_custom_call.1} parent=5 // pred_region
      %s117 = ssub.s32 %s9, 1
      // Predicated region
      $region13: #{tpu_custom_call.1} parent=11 // pred_check
        %p118 = pneg %p56
      $region14: #{tpu_custom_call.1} parent=11 // pred_check_branch
        %120 = sbr.rel (%p118) target = $region16
      $region15: #{tpu_custom_call.1} parent=11 // pred_region
        _
      $region16: #{tpu_custom_call.1} parent=11 // pred_fallthru
        _
      // Predicated region
      $region17: #{tpu_custom_call.1} parent=11 // pred_check
        %p121 = pneg %p77
      $region18: #{tpu_custom_call.1} parent=11 // pred_check_branch
        %123 = sbr.rel (%p121) target = $region20
      $region19: #{tpu_custom_call.1} parent=11 // pred_region
        _
      $region20: #{tpu_custom_call.1} parent=11 // pred_fallthru
        _
    $region12: #{tpu_custom_call.1} parent=5 // pred_fallthru
      _
    %p124 = scmp.lt.s32.totalorder %s9, 3
    // Predicated region
    $region21: #{tpu_custom_call.1} parent=5 // pred_check
      %p125 = pneg %p124
    $region22: #{tpu_custom_call.1} parent=5 // pred_check_branch
      %127 = sbr.rel (%p125) target = $region24
    $region23: #{tpu_custom_call.1} parent=5 // pred_region
      // Predicated region
      $region25: #{tpu_custom_call.1} parent=23 // pred_check
        %p128 = pneg %p29
      $region26: #{tpu_custom_call.1} parent=23 // pred_check_branch
        %130 = sbr.rel (%p128) target = $region28
      $region27: #{tpu_custom_call.1} parent=23 // pred_region
        %s131 = smul.u32 16, %s9
        %p132 = scmp.lt.s32.totalorder %s131, 47
        %s133 = scalar_select %p132, %s131, 47
        %s134 = smul.addr %s133, 8
        %s135 = scalar_lea.vmem %s0, %s134
        %s136 = smul.u32 16, %s9
      $region28: #{tpu_custom_call.1} parent=23 // pred_fallthru
        _
    $region24: #{tpu_custom_call.1} parent=5 // pred_fallthru
      _
    %p137 = scmp.le.s32.totalorder 1, %s9
    %p138 = scmp.lt.s32.totalorder %s9, 4
    %p139 = pnand %p137, %p138
    %p140 = pneg %p139
    // Predicated region
    $region29: #{tpu_custom_call.1} parent=5 // pred_check
      _
    $region30: #{tpu_custom_call.1} parent=5 // pred_check_branch
      %142 = sbr.rel (%p139) target = $region32
    $region31: #{tpu_custom_call.1} parent=5 // pred_region
      %s143 = ssub.s32 %s9, 1
      %s144 = smul.u32 16, %s14
      %p145 = scmp.lt.s32.totalorder %s144, 47
      %s146 = scalar_select %p145, %s144, 47
      %s147 = smul.addr %s146, 8
      %s148 = scalar_lea.vmem %s0, %s147
      %p149 = pneg %p35
      %p150 = pneg %p32
      %p151 = pneg %p56
      %p152 = pneg %p53
      %p153 = pneg %p77
      %p154 = pneg %p74
      %p155 = pneg %p103
      %p156 = pneg %p100
      %s157 = smul.u32 16, %s14
      %p158 = scmp.lt.s32.totalorder %s157, 47
      %s159 = scalar_select %p158, %s157, 47
      %s160 = smul.addr %s159, 8
      %s161 = scalar_lea.vmem %s3, %s160
      %s162 = smul.u32 16, %s14
      %p163 = scmp.lt.s32.totalorder %s162, 47
      %s164 = scalar_select %p163, %s162, 47
      %s165 = smul.addr %s164, 8
      %s166 = scalar_lea.vmem %s0, %s165
      %s167 = smul.u32 16, %s14
      %s168 = smul.u32 16, %s14
      %p169 = scmp.lt.s32.totalorder %s168, 47
      %s170 = scalar_select %p169, %s168, 47
      %s171 = smul.addr %s170, 8
      %s172 = scalar_lea.vmem %s3, %s171
      %s173 = smul.u32 16, %s14
      %v174 = vld [vmem:[%s166] sm:$0xff]
      %v175 = vld [vmem:[%s166 + $0x8] sm:$0xff]
      %v176 = vld [vmem:[%s166 + $0x10] sm:$0xff]
      %v177 = vld [vmem:[%s166 + $0x18] sm:$0xff]
      %v178 = vld [vmem:[%s166 + $0x20] sm:$0xff]
      %v179 = vld [vmem:[%s166 + $0x28] sm:$0xff]
      %v180 = vld [vmem:[%s166 + $0x30] sm:$0xff]
      %v181 = vld [vmem:[%s166 + $0x38] sm:$0xff]
      %v182 = vld [vmem:[%s166 + $0x40] sm:$0xff]
      %v183 = vld [vmem:[%s166 + $0x48] sm:$0xff]
      %v184 = vld [vmem:[%s166 + $0x50] sm:$0xff]
      %v185 = vld [vmem:[%s166 + $0x58] sm:$0xff]
      %v186 = vld [vmem:[%s166 + $0x60] sm:$0xff]
      %v187 = vld [vmem:[%s166 + $0x68] sm:$0xff]
      %v188 = vld [vmem:[%s166 + $0x70] sm:$0xff]
      %v189 = vld [vmem:[%s166 + $0x78] sm:$0xff]
      %vm190 = vcmask 261120
      %v191 = vsel %vm190, %v174, 0.0
      %192 = vadd.xlane.f32.xlu0 %v191
      %v193 = vpop.xlane.xlu0 %192
      %v194 = vsel %vm190, %v175, 0.0
      %195 = vadd.xlane.f32.xlu0 %v194
      %v196 = vpop.xlane.xlu0 %195
      %v197 = vsel %vm190, %v176, 0.0
      %198 = vadd.xlane.f32.xlu0 %v197
      %v199 = vpop.xlane.xlu0 %198
      %v200 = vsel %vm190, %v177, 0.0
      %201 = vadd.xlane.f32.xlu0 %v200
      %v202 = vpop.xlane.xlu0 %201
      %v203 = vsel %vm190, %v178, 0.0
      %204 = vadd.xlane.f32.xlu0 %v203
      %v205 = vpop.xlane.xlu0 %204
      %v206 = vsel %vm190, %v179, 0.0
      %207 = vadd.xlane.f32.xlu0 %v206
      %v208 = vpop.xlane.xlu0 %207
      %v209 = vsel %vm190, %v180, 0.0
      %210 = vadd.xlane.f32.xlu0 %v209
      %v211 = vpop.xlane.xlu0 %210
      %v212 = vsel %vm190, %v181, 0.0
      %213 = vadd.xlane.f32.xlu0 %v212
      %v214 = vpop.xlane.xlu0 %213
      %v215 = vsel %vm190, %v182, 0.0
      %216 = vadd.xlane.f32.xlu0 %v215
      %v217 = vpop.xlane.xlu0 %216
      %v218 = vsel %vm190, %v183, 0.0
      %219 = vadd.xlane.f32.xlu0 %v218
      %v220 = vpop.xlane.xlu0 %219
      %v221 = vsel %vm190, %v184, 0.0
      %222 = vadd.xlane.f32.xlu0 %v221
      %v223 = vpop.xlane.xlu0 %222
      %v224 = vsel %vm190, %v185, 0.0
      %225 = vadd.xlane.f32.xlu0 %v224
      %v226 = vpop.xlane.xlu0 %225
      %v227 = vsel %vm190, %v186, 0.0
      %228 = vadd.xlane.f32.xlu0 %v227
      %v229 = vpop.xlane.xlu0 %228
      %v230 = vsel %vm190, %v187, 0.0
      %231 = vadd.xlane.f32.xlu0 %v230
      %v232 = vpop.xlane.xlu0 %231
      %v233 = vsel %vm190, %v188, 0.0
      %234 = vadd.xlane.f32.xlu0 %v233
      %v235 = vpop.xlane.xlu0 %234
      %v236 = vsel %vm190, %v189, 0.0
      %237 = vadd.xlane.f32.xlu0 %v236
      %v238 = vpop.xlane.xlu0 %237
      %v239 = vrcp.pop 32.0
      %v240 = vmul.f32 %v193, %v239
      %v241 = vmul.f32 %v196, %v239
      %v242 = vmul.f32 %v199, %v239
      %v243 = vmul.f32 %v202, %v239
      %v244 = vmul.f32 %v205, %v239
      %v245 = vmul.f32 %v208, %v239
      %v246 = vmul.f32 %v211, %v239
      %v247 = vmul.f32 %v214, %v239
      %v248 = vmul.f32 %v217, %v239
      %v249 = vmul.f32 %v220, %v239
      %v250 = vmul.f32 %v223, %v239
      %v251 = vmul.f32 %v226, %v239
      %v252 = vmul.f32 %v229, %v239
      %v253 = vmul.f32 %v232, %v239
      %v254 = vmul.f32 %v235, %v239
      %v255 = vmul.f32 %v238, %v239
      %v256 = vsub.f32 %v174, %v240
      %v257 = vsub.f32 %v175, %v241
      %v258 = vsub.f32 %v176, %v242
      %v259 = vsub.f32 %v177, %v243
      %v260 = vsub.f32 %v178, %v244
      %v261 = vsub.f32 %v179, %v245
      %v262 = vsub.f32 %v180, %v246
      %v263 = vsub.f32 %v181, %v247
      %v264 = vsub.f32 %v182, %v248
      %v265 = vsub.f32 %v183, %v249
      %v266 = vsub.f32 %v184, %v250
      %v267 = vsub.f32 %v185, %v251
      %v268 = vsub.f32 %v186, %v252
      %v269 = vsub.f32 %v187, %v253
      %v270 = vsub.f32 %v188, %v254
      %v271 = vsub.f32 %v189, %v255
      %v272 = vmul.f32 %v256, %v256
      %v273 = vmul.f32 %v257, %v257
      %v274 = vmul.f32 %v258, %v258
      %v275 = vmul.f32 %v259, %v259
      %v276 = vmul.f32 %v260, %v260
      %v277 = vmul.f32 %v261, %v261
      %v278 = vmul.f32 %v262, %v262
      %v279 = vmul.f32 %v263, %v263
      %v280 = vmul.f32 %v264, %v264
      %v281 = vmul.f32 %v265, %v265
      %v282 = vmul.f32 %v266, %v266
      %v283 = vmul.f32 %v267, %v267
      %v284 = vmul.f32 %v268, %v268
      %v285 = vmul.f32 %v269, %v269
      %v286 = vmul.f32 %v270, %v270
      %v287 = vmul.f32 %v271, %v271
      %v288 = vsel %vm190, %v272, 0.0
      %289 = vadd.xlane.f32.xlu0 %v288
      %v290 = vpop.xlane.xlu0 %289
      %v291 = vsel %vm190, %v273, 0.0
      %292 = vadd.xlane.f32.xlu0 %v291
      %v293 = vpop.xlane.xlu0 %292
      %v294 = vsel %vm190, %v274, 0.0
      %295 = vadd.xlane.f32.xlu0 %v294
      %v296 = vpop.xlane.xlu0 %295
      %v297 = vsel %vm190, %v275, 0.0
      %298 = vadd.xlane.f32.xlu0 %v297
      %v299 = vpop.xlane.xlu0 %298
      %v300 = vsel %vm190, %v276, 0.0
      %301 = vadd.xlane.f32.xlu0 %v300
      %v302 = vpop.xlane.xlu0 %301
      %v303 = vsel %vm190, %v277, 0.0
      %304 = vadd.xlane.f32.xlu0 %v303
      %v305 = vpop.xlane.xlu0 %304
      %v306 = vsel %vm190, %v278, 0.0
      %307 = vadd.xlane.f32.xlu0 %v306
      %v308 = vpop.xlane.xlu0 %307
      %v309 = vsel %vm190, %v279, 0.0
      %310 = vadd.xlane.f32.xlu0 %v309
      %v311 = vpop.xlane.xlu0 %310
      %v312 = vsel %vm190, %v280, 0.0
      %313 = vadd.xlane.f32.xlu0 %v312
      %v314 = vpop.xlane.xlu0 %313
      %v315 = vsel %vm190, %v281, 0.0
      %316 = vadd.xlane.f32.xlu0 %v315
      %v317 = vpop.xlane.xlu0 %316
      %v318 = vsel %vm190, %v282, 0.0
      %319 = vadd.xlane.f32.xlu0 %v318
      %v320 = vpop.xlane.xlu0 %319
      %v321 = vsel %vm190, %v283, 0.0
      %322 = vadd.xlane.f32.xlu0 %v321
      %v323 = vpop.xlane.xlu0 %322
      %v324 = vsel %vm190, %v284, 0.0
      %325 = vadd.xlane.f32.xlu0 %v324
      %v326 = vpop.xlane.xlu0 %325
      %v327 = vsel %vm190, %v285, 0.0
      %328 = vadd.xlane.f32.xlu0 %v327
      %v329 = vpop.xlane.xlu0 %328
      %v330 = vsel %vm190, %v286, 0.0
      %331 = vadd.xlane.f32.xlu0 %v330
      %v332 = vpop.xlane.xlu0 %331
      %v333 = vsel %vm190, %v287, 0.0
      %334 = vadd.xlane.f32.xlu0 %v333
      %v335 = vpop.xlane.xlu0 %334
      %v336 = vmul.f32 %v290, %v239
      %v337 = vmul.f32 %v293, %v239
      %v338 = vmul.f32 %v296, %v239
      %v339 = vmul.f32 %v299, %v239
      %v340 = vmul.f32 %v302, %v239
      %v341 = vmul.f32 %v305, %v239
      %v342 = vmul.f32 %v308, %v239
      %v343 = vmul.f32 %v311, %v239
      %v344 = vmul.f32 %v314, %v239
      %v345 = vmul.f32 %v317, %v239
      %v346 = vmul.f32 %v320, %v239
      %v347 = vmul.f32 %v323, %v239
      %v348 = vmul.f32 %v326, %v239
      %v349 = vmul.f32 %v329, %v239
      %v350 = vmul.f32 %v332, %v239
      %v351 = vmul.f32 %v335, %v239
      %v352 = vadd.f32 %v336, 1e-05
      %v353 = vadd.f32 %v337, 1e-05
      %v354 = vadd.f32 %v338, 1e-05
      %v355 = vadd.f32 %v339, 1e-05
      %v356 = vadd.f32 %v340, 1e-05
      %v357 = vadd.f32 %v341, 1e-05
      %v358 = vadd.f32 %v342, 1e-05
      %v359 = vadd.f32 %v343, 1e-05
      %v360 = vadd.f32 %v344, 1e-05
      %v361 = vadd.f32 %v345, 1e-05
      %v362 = vadd.f32 %v346, 1e-05
      %v363 = vadd.f32 %v347, 1e-05
      %v364 = vadd.f32 %v348, 1e-05
      %v365 = vadd.f32 %v349, 1e-05
      %v366 = vadd.f32 %v350, 1e-05
      %v367 = vadd.f32 %v351, 1e-05
      %v368 = vrsqrt.pop %v352
      %v369 = vrsqrt.pop %v353
      %v370 = vrsqrt.pop %v354
      %v371 = vrsqrt.pop %v355
      %v372 = vrsqrt.pop %v356
      %v373 = vrsqrt.pop %v357
      %v374 = vrsqrt.pop %v358
      %v375 = vrsqrt.pop %v359
      %v376 = vrsqrt.pop %v360
      %v377 = vrsqrt.pop %v361
      %v378 = vrsqrt.pop %v362
      %v379 = vrsqrt.pop %v363
      %v380 = vrsqrt.pop %v364
      %v381 = vrsqrt.pop %v365
      %v382 = vrsqrt.pop %v366
      %v383 = vrsqrt.pop %v367
      %v384 = vmul.f32 %v256, %v368
      %v385 = vmul.f32 %v257, %v369
      %v386 = vmul.f32 %v258, %v370
      %v387 = vmul.f32 %v259, %v371
      %v388 = vmul.f32 %v260, %v372
      %v389 = vmul.f32 %v261, %v373
      %v390 = vmul.f32 %v262, %v374
      %v391 = vmul.f32 %v263, %v375
      %v392 = vmul.f32 %v264, %v376
      %v393 = vmul.f32 %v265, %v377
      %v394 = vmul.f32 %v266, %v378
      %v395 = vmul.f32 %v267, %v379
      %v396 = vmul.f32 %v268, %v380
      %v397 = vmul.f32 %v269, %v381
      %v398 = vmul.f32 %v270, %v382
      %v399 = vmul.f32 %v271, %v383
      %v400 = vld [vmem:[%s1] sm:$0x1]
      %v402 = vlaneseq
      %v403 = vshrl.u32 %v402, 7
      %v404 = vsub.s32 0, %v403
      %v405 = vrot.slane %v400, %v404
      %v407 = vmul.f32 %v384, %v405
      %v408 = vmul.f32 %v385, %v405
      %v409 = vmul.f32 %v386, %v405
      %v410 = vmul.f32 %v387, %v405
      %v411 = vmul.f32 %v388, %v405
      %v412 = vmul.f32 %v389, %v405
      %v413 = vmul.f32 %v390, %v405
      %v414 = vmul.f32 %v391, %v405
      %v415 = vmul.f32 %v392, %v405
      %v416 = vmul.f32 %v393, %v405
      %v417 = vmul.f32 %v394, %v405
      %v418 = vmul.f32 %v395, %v405
      %v419 = vmul.f32 %v396, %v405
      %v420 = vmul.f32 %v397, %v405
      %v421 = vmul.f32 %v398, %v405
      %v422 = vmul.f32 %v399, %v405
      %v423 = vld [vmem:[%s2] sm:$0x1]
      %v425 = vlaneseq
      %v426 = vshrl.u32 %v425, 7
      %v427 = vsub.s32 0, %v426
      %v428 = vrot.slane %v423, %v427
      %v430 = vadd.f32 %v407, %v428
      %v431 = vadd.f32 %v408, %v428
      %v432 = vadd.f32 %v409, %v428
      %v433 = vadd.f32 %v410, %v428
      %v434 = vadd.f32 %v411, %v428
      %v435 = vadd.f32 %v412, %v428
      %v436 = vadd.f32 %v413, %v428
      %v437 = vadd.f32 %v414, %v428
      %v438 = vadd.f32 %v415, %v428
      %v439 = vadd.f32 %v416, %v428
      %v440 = vadd.f32 %v417, %v428
      %v441 = vadd.f32 %v418, %v428
      %v442 = vadd.f32 %v419, %v428
      %v443 = vadd.f32 %v420, %v428
      %v444 = vadd.f32 %v421, %v428
      %v445 = vadd.f32 %v422, %v428
      %446 = vst.msk [vmem:[%s172] sm:$0xff] %vm190, %v430
      %447 = vst.msk [vmem:[%s172 + $0x8] sm:$0xff] %vm190, %v431
      %448 = vst.msk [vmem:[%s172 + $0x10] sm:$0xff] %vm190, %v432
      %449 = vst.msk [vmem:[%s172 + $0x18] sm:$0xff] %vm190, %v433
      %450 = vst.msk [vmem:[%s172 + $0x20] sm:$0xff] %vm190, %v434
      %451 = vst.msk [vmem:[%s172 + $0x28] sm:$0xff] %vm190, %v435
      %452 = vst.msk [vmem:[%s172 + $0x30] sm:$0xff] %vm190, %v436
      %453 = vst.msk [vmem:[%s172 + $0x38] sm:$0xff] %vm190, %v437
      %454 = vst.msk [vmem:[%s172 + $0x40] sm:$0xff] %vm190, %v438
      %455 = vst.msk [vmem:[%s172 + $0x48] sm:$0xff] %vm190, %v439
      %456 = vst.msk [vmem:[%s172 + $0x50] sm:$0xff] %vm190, %v440
      %457 = vst.msk [vmem:[%s172 + $0x58] sm:$0xff] %vm190, %v441
      %458 = vst.msk [vmem:[%s172 + $0x60] sm:$0xff] %vm190, %v442
      %459 = vst.msk [vmem:[%s172 + $0x68] sm:$0xff] %vm190, %v443
      %460 = vst.msk [vmem:[%s172 + $0x70] sm:$0xff] %vm190, %v444
      %461 = vst.msk [vmem:[%s172 + $0x78] sm:$0xff] %vm190, %v445
      %s462 = smul.u32 16, %s14
      %p463 = scmp.lt.s32.totalorder %s462, 47
      %s464 = scalar_select %p463, %s462, 47
      %s465 = smul.addr %s464, 8
      %s466 = scalar_lea.vmem %s3, %s465
      // Predicated region
      $region33: #{tpu_custom_call.1} parent=31 // pred_check
        %p467 = pneg %p100
      $region34: #{tpu_custom_call.1} parent=31 // pred_check_branch
        %469 = sbr.rel (%p467) target = $region36
      $region35: #{tpu_custom_call.1} parent=31 // pred_region
        %s470 = smul.u32 16, %s14
      $region36: #{tpu_custom_call.1} parent=31 // pred_fallthru
        _
    $region32: #{tpu_custom_call.1} parent=5 // pred_fallthru
      _
    %p471 = scmp.le.s32.totalorder 2, %s9
    // Predicated region
    $region37: #{tpu_custom_call.1} parent=5 // pred_check
      %p472 = pneg %p471
    $region38: #{tpu_custom_call.1} parent=5 // pred_check_branch
      %474 = sbr.rel (%p472) target = $region40
    $region39: #{tpu_custom_call.1} parent=5 // pred_region
      %s475 = ssub.s32 %s9, 2
      // Predicated region
      $region41: #{tpu_custom_call.1} parent=39 // pred_check
        %p476 = pneg %p106
      $region42: #{tpu_custom_call.1} parent=39 // pred_check_branch
        %478 = sbr.rel (%p476) target = $region44
      $region43: #{tpu_custom_call.1} parent=39 // pred_region
        %s479 = smul.u32 16, %s15
        %p480 = scmp.lt.s32.totalorder %s479, 47
        %s481 = scalar_select %p480, %s479, 47
        %s482 = smul.addr %s481, 8
        %s483 = scalar_lea.vmem %s3, %s482
      $region44: #{tpu_custom_call.1} parent=39 // pred_fallthru
        _
    $region40: #{tpu_custom_call.1} parent=5 // pred_fallthru
      _
  $region6: #{tpu_custom_call.1} parent=0 // loop_footer
    %s13 = sadd.s32 1, %s9
  $region7: #{tpu_custom_call.1} parent=0 // loop_footer_branch
    %8 = sbr.rel target = $region3
  $region8: #{tpu_custom_call.1} parent=0 // loop_exit
    _

</llo_original>
